<compile_context>
chip_gen: v7x
topology: tpu7x:2x2x1
jax: 0.10.0
libtpu: 0.0.40
codegen_flags: <defaults>
</compile_context>

<pallas_src>
import functools

import jax
import jax.numpy as jnp
from jax.experimental import pallas as pl
from jax.experimental.pallas import tpu as pltpu


def _balanced_noise_topk_kernel(y_ref, s_ref, z_ref, out_ref, acc_ref, *,
                                k, epsilon, m_total):
    # y_ref:   (TB, 1) int32   labels for this batch tile
    # s_ref:   (TB, D)         scores (any float dtype; upcast to f32)
    # z_ref:   (TB, TM, D)     noise tile (any float dtype; upcast to f32)
    # out_ref: (TB, 1) f32     per-row hinge term (written on last noise step)
    # acc_ref: (TB, 1) f32     running sum of kth noised values over M tiles
    m_step = pl.program_id(1)

    @pl.when(m_step == 0)
    def _init():
        acc_ref[...] = jnp.zeros_like(acc_ref)

    s = s_ref[...].astype(jnp.float32)                             # (TB, D)
    z = z_ref[...].astype(jnp.float32)                             # (TB, TM, D)
    _, d = s.shape

    # Noised scores for this tile of noise samples.
    noised = s[:, None, :] + jnp.float32(epsilon) * z              # (TB, TM, D)

    # (k+1)-th largest along the class axis: strip the current max k times
    # (first occurrence on ties, matching torch.topk), then take the max of
    # what remains.  The iota is kept at (1, 1, D) and broadcast to keep vreg
    # pressure / VMEM footprint low.
    d_iota = jax.lax.broadcasted_iota(jnp.int32, (1, 1, d), 2)
    neg_inf = jnp.float32(-jnp.inf)
    work = noised
    for _ in range(k):
        cur_max = jnp.max(work, axis=-1, keepdims=True)            # (TB, TM, 1)
        masked_iota = jnp.where(work == cur_max, d_iota, d)        # (TB, TM, D)
        first_idx = jnp.min(masked_iota, axis=-1, keepdims=True)   # (TB, TM, 1)
        work = jnp.where(d_iota == first_idx, neg_inf, work)
    kth_vals = jnp.max(work, axis=-1)                              # (TB, TM)

    acc_ref[...] += jnp.sum(kth_vals, axis=-1, keepdims=True)      # (TB, 1)

    @pl.when(m_step == pl.num_programs(1) - 1)
    def _finalize():
        # correct_scores = s[b, y[b]] via a vectorized one-hot gather.
        y = y_ref[...]                                             # (TB, 1)
        class_iota = jax.lax.broadcasted_iota(jnp.int32, (1, d), 1)
        one_hot = (class_iota == y).astype(jnp.float32)            # (TB, D)
        correct = jnp.sum(s * one_hot, axis=-1, keepdims=True)     # (TB, 1)
        skp1 = acc_ref[...] * jnp.float32(1.0 / m_total)           # (TB, 1)
        out_ref[...] = jnp.maximum(1.0 + skp1 - correct, 0.0)


def _pick_tile(n, cap):
    """Largest tile t <= cap with n % t == 0 and (t % 8 == 0 or t == n)."""
    if n <= cap:
        return n
    for t in range(cap - cap % 8, 0, -8):
        if n % t == 0:
            return t
    return n  # full axis is always legal


def balanced_noise_topk_loss(s, y, Z, *, k, epsilon, tb=None, tm=None):
    """s: (B, D) float, y: (B,) int, Z: (B, M, D) float  ->  scalar f32 loss."""
    B, D = s.shape
    M = Z.shape[1]
    assert Z.shape == (B, M, D)
    assert k < D, "need k+1 <= number of classes for the top-k"

    z_itemsize = jnp.dtype(Z.dtype).itemsize
    if tb is None:
        tb = _pick_tile(B, 128)
    if tm is None:
        # Keep the double-buffered Z tiles <= ~6 MiB so they fit the smallest
        # scoped-VMEM defaults across generations (v5e 16 MiB; v7x 32 of only
        # 64 MiB physical) without flag/vmem_limit overrides.
        budget = 6 * 1024 * 1024
        cap = max(8, budget // max(1, 2 * tb * D * z_itemsize))
        tm = _pick_tile(M, cap)
    assert B % tb == 0 and M % tm == 0, (B, tb, M, tm)

    nb, nm = B // tb, M // tm
    y2 = y.astype(jnp.int32).reshape(B, 1)

    kernel = functools.partial(_balanced_noise_topk_kernel,
                               k=k, epsilon=epsilon, m_total=M)

    cost = pl.CostEstimate(
        flops=(6 * k + 3) * B * M * D,
        transcendentals=0,
        bytes_accessed=(B * M * D * z_itemsize
                        + nm * B * D * jnp.dtype(s.dtype).itemsize
                        + 2 * B * 4),
    )

    per_row = pl.pallas_call(
        kernel,
        out_shape=jax.ShapeDtypeStruct((B, 1), jnp.float32),
        grid_spec=pltpu.PrefetchScalarGridSpec(
            num_scalar_prefetch=0,
            grid=(nb, nm),
            in_specs=[
                pl.BlockSpec((tb, 1), lambda i, j: (i, 0)),
                pl.BlockSpec((tb, D), lambda i, j: (i, 0)),
                pl.BlockSpec((tb, tm, D), lambda i, j: (i, j, 0)),
            ],
            out_specs=pl.BlockSpec((tb, 1), lambda i, j: (i, 0)),
            scratch_shapes=[pltpu.VMEM((tb, 1), jnp.float32)],
        ),
        compiler_params=pltpu.CompilerParams(
            dimension_semantics=("parallel", "arbitrary")),
        cost_estimate=cost,
    )(y2, s, Z)

    # Final scalar: mean of the per-row hinge terms (tiny; kept outside the
    # kernel so the batch grid axis stays truly parallel / megacore-safe).
    return jnp.mean(per_row)


def _reference_loss(s, y, Z, *, k, epsilon):
    """Pure-JAX reference mirroring the PyTorch module (f32 arithmetic)."""
    noised = s[:, None, :].astype(jnp.float32) + epsilon * Z.astype(jnp.float32)
    sorted_desc = -jnp.sort(-noised, axis=-1)                      # descending
    kth = sorted_desc[..., k]                                      # (B, M)
    skp1 = jnp.mean(kth, axis=-1)                                  # (B,)
    correct = s.astype(jnp.float32)[jnp.arange(s.shape[0]), y]     # (B,)
    return jnp.mean(jnp.maximum(1.0 + skp1 - correct, 0.0))


if __name__ == "__main__":
    # Module hyperparameters (from __init__): k, n_sample, epsilon.
    k = 2
    n_sample = 32
    epsilon = 0.1

    B, D, M = 16, 32, n_sample

    key = jax.random.PRNGKey(0)
    ks, ky, kz = jax.random.split(key, 3)
    s = jax.random.normal(ks, (B, D), dtype=jnp.float32)
    y = jax.random.randint(ky, (B,), 0, D, dtype=jnp.int32)
    # Noise Z, generated outside the kernel (matches torch.randn in forward),
    # stored as (B, M, D) so the class axis is lane-major.
    Z = jax.random.normal(kz, (B, M, D), dtype=jnp.float32)

    # f32 path; explicit small tiles exercise the (batch, noise) grid and the
    # cross-step accumulator (grid = (2, 2) here).
    loss = balanced_noise_topk_loss(s, y, Z, k=k, epsilon=epsilon, tb=8, tm=16)
    loss = jax.block_until_ready(loss)
    ref = _reference_loss(s, y, Z, k=k, epsilon=epsilon)
    assert jnp.allclose(loss, ref, rtol=1e-5, atol=1e-5), (loss, ref)

    # bf16 noise path: halves HBM traffic for the dominant Z stream; compute
    # stays in f32 inside the kernel, so it matches an f32 reference that sees
    # the same bf16-rounded noise.
    Z16 = Z.astype(jnp.bfloat16)
    loss16 = balanced_noise_topk_loss(s, y, Z16, k=k, epsilon=epsilon, tb=8, tm=16)
    loss16 = jax.block_until_ready(loss16)
    ref16 = _reference_loss(s, y, Z16.astype(jnp.float32), k=k, epsilon=epsilon)
    assert jnp.allclose(loss16, ref16, rtol=1e-5, atol=1e-5), (loss16, ref16)

    print("KERNEL_OK")
</pallas_src>

<mosaic_0001>
module attributes {stable_mosaic.version = 11 : i64} {
  func.func @_balanced_noise_topk_kernel(%arg0: i32, %arg1: i32, %arg2: memref<8x1xi32, #tpu.memory_space<vmem>>, %arg3: memref<8x32xf32, #tpu.memory_space<vmem>>, %arg4: memref<8x16x32xf32, #tpu.memory_space<vmem>>, %arg5: memref<8x1xf32, #tpu.memory_space<vmem>>, %arg6: memref<8x1xf32, #tpu.memory_space<vmem>>) attributes {dimension_semantics = [#tpu.dimension_semantics<parallel>, #tpu.dimension_semantics<arbitrary>], iteration_bounds = array<i64: 2, 2>, scalar_prefetch = 0 : i64, scratch_operands = 1 : i64, tpu.core_type = #tpu.core_type<tc>, window_params = [{transform_indices = @transform_0, window_bounds = array<i64: 8, 1>}, {transform_indices = @transform_1, window_bounds = array<i64: 8, 32>}, {transform_indices = @transform_2, window_bounds = array<i64: 8, 16, 32>}, {transform_indices = @transform_3, window_bounds = array<i64: 8, 1>}]} {
    %c0_i32 = arith.constant 0 : i32
    %0 = arith.cmpi eq, %arg1, %c0_i32 : i32
    %1 = arith.extui %0 : i1 to i32
    %c0_i32_0 = arith.constant 0 : i32
    %2 = arith.cmpi ne, %1, %c0_i32_0 : i32
    scf.if %2 {
      %cst_19 = arith.constant 0.000000e+00 : f32
      %50 = vector.broadcast %cst_19 : f32 to vector<8x1xf32>
      %c0_20 = arith.constant 0 : index
      %c0_21 = arith.constant 0 : index
      %51 = vector.load %arg6[%c0_20, %c0_21] : memref<8x1xf32, #tpu.memory_space<vmem>>, vector<8x1xf32>
      tpu.vector_store %arg6[%c0_20, %c0_21], %50 {strides = array<i32>} : memref<8x1xf32, #tpu.memory_space<vmem>>, vector<8x1xf32>,
    } else {
    }
    %c0 = arith.constant 0 : index
    %c0_1 = arith.constant 0 : index
    %3 = vector.load %arg3[%c0, %c0_1] : memref<8x32xf32, #tpu.memory_space<vmem>>, vector<8x32xf32>
    %c0_2 = arith.constant 0 : index
    %c0_3 = arith.constant 0 : index
    %c0_4 = arith.constant 0 : index
    %4 = vector.load %arg4[%c0_2, %c0_3, %c0_4] : memref<8x16x32xf32, #tpu.memory_space<vmem>>, vector<8x16x32xf32>
    %5 = vector.shape_cast %3 : vector<8x32xf32> to vector<8x1x32xf32>
    %cst = arith.constant 1.000000e-01 : f32
    %6 = vector.broadcast %cst : f32 to vector<8x16x32xf32>
    %7 = arith.mulf %6, %4 : vector<8x16x32xf32>
    %8 = vector.broadcast %5 : vector<8x1x32xf32> to vector<8x16x32xf32>
    %9 = arith.addf %8, %7 : vector<8x16x32xf32>
    %10 = tpu.iota {dimensions = array<i32: 2>} : vector<1x1x32xi32>
    %cst_5 = arith.constant dense<0xFF800000> : vector<8x16xf32>
    %11 = vector.multi_reduction <maximumf>, %9, %cst_5 [2] : vector<8x16x32xf32> to vector<8x16xf32>
    %12 = vector.shape_cast %11 : vector<8x16xf32> to vector<8x16x1xf32>
    %13 = vector.broadcast %12 : vector<8x16x1xf32> to vector<8x16x32xf32>
    %14 = arith.cmpf oeq, %9, %13 : vector<8x16x32xf32>
    %c32_i32 = arith.constant 32 : i32
    %15 = vector.shape_cast %10 : vector<1x1x32xi32> to vector<1x1x32xi32>
    %16 = vector.broadcast %15 : vector<1x1x32xi32> to vector<8x16x32xi32>
    %17 = vector.broadcast %c32_i32 : i32 to vector<8x16x32xi32>
    %18 = arith.select %14, %16, %17 : vector<8x16x32xi1>, vector<8x16x32xi32>
    %cst_6 = arith.constant dense<2147483647> : vector<8x16xi32>
    %19 = vector.multi_reduction <minsi>, %18, %cst_6 [2] : vector<8x16x32xi32> to vector<8x16xi32>
    %20 = vector.shape_cast %19 : vector<8x16xi32> to vector<8x16x1xi32>
    %21 = vector.broadcast %10 : vector<1x1x32xi32> to vector<8x16x32xi32>
    %22 = vector.broadcast %20 : vector<8x16x1xi32> to vector<8x16x32xi32>
    %23 = arith.cmpi eq, %21, %22 : vector<8x16x32xi32>
    %cst_7 = arith.constant 0xFF800000 : f32
    %24 = vector.broadcast %cst_7 : f32 to vector<8x16x32xf32>
    %25 = arith.select %23, %24, %9 : vector<8x16x32xi1>, vector<8x16x32xf32>
    %cst_8 = arith.constant dense<0xFF800000> : vector<8x16xf32>
    %26 = vector.multi_reduction <maximumf>, %25, %cst_8 [2] : vector<8x16x32xf32> to vector<8x16xf32>
    %27 = vector.shape_cast %26 : vector<8x16xf32> to vector<8x16x1xf32>
    %28 = vector.broadcast %27 : vector<8x16x1xf32> to vector<8x16x32xf32>
    %29 = arith.cmpf oeq, %25, %28 : vector<8x16x32xf32>
    %c32_i32_9 = arith.constant 32 : i32
    %30 = vector.shape_cast %10 : vector<1x1x32xi32> to vector<1x1x32xi32>
    %31 = vector.broadcast %30 : vector<1x1x32xi32> to vector<8x16x32xi32>
    %32 = vector.broadcast %c32_i32_9 : i32 to vector<8x16x32xi32>
    %33 = arith.select %29, %31, %32 : vector<8x16x32xi1>, vector<8x16x32xi32>
    %cst_10 = arith.constant dense<2147483647> : vector<8x16xi32>
    %34 = vector.multi_reduction <minsi>, %33, %cst_10 [2] : vector<8x16x32xi32> to vector<8x16xi32>
    %35 = vector.shape_cast %34 : vector<8x16xi32> to vector<8x16x1xi32>
    %36 = vector.broadcast %10 : vector<1x1x32xi32> to vector<8x16x32xi32>
    %37 = vector.broadcast %35 : vector<8x16x1xi32> to vector<8x16x32xi32>
    %38 = arith.cmpi eq, %36, %37 : vector<8x16x32xi32>
    %cst_11 = arith.constant 0xFF800000 : f32
    %39 = vector.broadcast %cst_11 : f32 to vector<8x16x32xf32>
    %40 = arith.select %38, %39, %25 : vector<8x16x32xi1>, vector<8x16x32xf32>
    %cst_12 = arith.constant dense<0xFF800000> : vector<8x16xf32>
    %41 = vector.multi_reduction <maximumf>, %40, %cst_12 [2] : vector<8x16x32xf32> to vector<8x16xf32>
    %c0_13 = arith.constant 0 : index
    %c0_14 = arith.constant 0 : index
    %42 = vector.load %arg6[%c0_13, %c0_14] : memref<8x1xf32, #tpu.memory_space<vmem>>, vector<8x1xf32>
    %cst_15 = arith.constant dense<0.000000e+00> : vector<8xf32>
    %43 = vector.multi_reduction <add>, %41, %cst_15 [1] : vector<8x16xf32> to vector<8xf32>
    %44 = vector.shape_cast %43 : vector<8xf32> to vector<8x1xf32>
    %45 = arith.addf %42, %44 : vector<8x1xf32>
    %c0_16 = arith.constant 0 : index
    %c0_17 = arith.constant 0 : index
    %46 = vector.load %arg6[%c0_16, %c0_17] : memref<8x1xf32, #tpu.memory_space<vmem>>, vector<8x1xf32>
    tpu.vector_store %arg6[%c0_16, %c0_17], %45 {strides = array<i32>} : memref<8x1xf32, #tpu.memory_space<vmem>>, vector<8x1xf32>,
    %c1_i32 = arith.constant 1 : i32
    %47 = arith.cmpi eq, %arg1, %c1_i32 : i32
    %48 = arith.extui %47 : i1 to i32
    %c0_i32_18 = arith.constant 0 : i32
    %49 = arith.cmpi ne, %48, %c0_i32_18 : i32
    scf.if %49 {
      %c0_19 = arith.constant 0 : index
      %c0_20 = arith.constant 0 : index
      %50 = vector.load %arg2[%c0_19, %c0_20] : memref<8x1xi32, #tpu.memory_space<vmem>>, vector<8x1xi32>
      %51 = tpu.iota {dimensions = array<i32: 1>} : vector<1x32xi32>
      %52 = vector.broadcast %51 : vector<1x32xi32> to vector<8x32xi32>
      %53 = vector.broadcast %50 : vector<8x1xi32> to vector<8x32xi32>
      %54 = arith.cmpi eq, %52, %53 : vector<8x32xi32>
      %55 = arith.extui %54 : vector<8x32xi1> to vector<8x32xi32>
      %56 = arith.sitofp %55 : vector<8x32xi32> to vector<8x32xf32>
      %57 = arith.mulf %3, %56 : vector<8x32xf32>
      %cst_21 = arith.constant dense<0.000000e+00> : vector<8xf32>
      %58 = vector.multi_reduction <add>, %57, %cst_21 [1] : vector<8x32xf32> to vector<8xf32>
      %59 = vector.shape_cast %58 : vector<8xf32> to vector<8x1xf32>
      %c0_22 = arith.constant 0 : index
      %c0_23 = arith.constant 0 : index
      %60 = vector.load %arg6[%c0_22, %c0_23] : memref<8x1xf32, #tpu.memory_space<vmem>>, vector<8x1xf32>
      %cst_24 = arith.constant 3.125000e-02 : f32
      %61 = vector.broadcast %cst_24 : f32 to vector<8x1xf32>
      %62 = arith.mulf %60, %61 : vector<8x1xf32>
      %cst_25 = arith.constant 1.000000e+00 : f32
      %63 = vector.broadcast %cst_25 : f32 to vector<8x1xf32>
      %64 = arith.addf %63, %62 : vector<8x1xf32>
      %65 = arith.subf %64, %59 : vector<8x1xf32>
      %cst_26 = arith.constant 0.000000e+00 : f32
      %66 = vector.broadcast %cst_26 : f32 to vector<8x1xf32>
      %67 = arith.maximumf %65, %66 : vector<8x1xf32>
      %c0_27 = arith.constant 0 : index
      %c0_28 = arith.constant 0 : index
      %68 = vector.load %arg5[%c0_27, %c0_28] : memref<8x1xf32, #tpu.memory_space<vmem>>, vector<8x1xf32>
      tpu.vector_store %arg5[%c0_27, %c0_28], %67 {strides = array<i32>} : memref<8x1xf32, #tpu.memory_space<vmem>>, vector<8x1xf32>,
    } else {
    }
    return
  }
  func.func @transform_0(%arg0: i32, %arg1: i32) -> (i32, i32) {
    %c0_i32 = arith.constant 0 : i32
    %c0_i32_0 = arith.constant 0 : i32
    return %arg0, %c0_i32 : i32, i32
  }
  func.func @transform_1(%arg0: i32, %arg1: i32) -> (i32, i32) {
    %c0_i32 = arith.constant 0 : i32
    %c0_i32_0 = arith.constant 0 : i32
    return %arg0, %c0_i32 : i32, i32
  }
  func.func @transform_2(%arg0: i32, %arg1: i32) -> (i32, i32, i32) {
    %c0_i32 = arith.constant 0 : i32
    %c0_i32_0 = arith.constant 0 : i32
    return %arg0, %arg1, %c0_i32 : i32, i32, i32
  }
  func.func @transform_3(%arg0: i32, %arg1: i32) -> (i32, i32) {
    %c0_i32 = arith.constant 0 : i32
    %c0_i32_0 = arith.constant 0 : i32
    return %arg0, %c0_i32 : i32, i32
  }
}

</mosaic_0001>

<llo_original>
// kernel: tpu_custom_call.1
$region0: #{tpu_custom_call.1}
  #allocation0 [shape = 'u32[]', space=smem, size = 0x4, offset = 0x4, fixed_abs, tag = 'smem constant byte address 0x4 - core index']
  #allocation1 [shape = 'u32[144,128]{1,0:T(1,128)}', space=vmem, size = 0x12000, scoped, tag = 'internal scratch']
  #allocation2 [shape = 'f32[8,1]{1,0:T(8,128)}', space=vmem, size = 0x1000, scoped, tag = 'scratch operand']
  #allocation5 [shape = 's32[]', space=sflag, size = 0x4, offset = 0, fixed_abs, tag = 'sflag constant byte address 0x0 - dummy sync flag']
  %s0 = inlined_call_operand.vmem [shape: s32[16,1], index: 0, kind: input, shape index: {}]
  %s1 = inlined_call_operand.vmem [shape: f32[16,32], index: 1, kind: input, shape index: {}]
  %s2 = inlined_call_operand.hbm [shape: f32[16,32,32], index: 2, kind: input, shape index: {}]
  %s3 = inlined_call_operand.vmem [shape: f32[16,1], index: 3, kind: output, shape index: {}]
  %s4 = sld [smem:[#allocation0]]
  $region57: #{tpu_custom_call.1} parent=0
    _
  %s6 = ssub.s32 1, %s4
  %s7 = scalar_select 0, %s6, %s4
  $region1: #{tpu_custom_call.1} parent=0
    #allocation3 [shape = 'u8[131072]{0}', space=vmem, size = 0x20000, scoped, tag = 'input window, operand 2']
    #allocation4 [shape = 's32[2]{0}', space=sflag, size = 0x8, scoped, tag = 'scoped memory for tpu_custom_call.1']
    %8 = vsyncpa [#allocation4], 0
    %s9 = scalar_lea.sflag [#allocation4], 1
    %10 = vsyncpa %s9, 0
    loop: start=0, step=1, limit=6
    $region2: #{tpu_custom_call.1} parent=1 // loop_pre_header
      _
    $region3: #{tpu_custom_call.1} parent=1 // loop_header
      %s12 = sphi 0, %s16
      %p13 = scmp.ge.s32.totalorder %s12, 6
      %s19 = sphi 0, %s31
      %s20 = sphi 0, %s27
      %s21 = sphi 0, %s19
      %s22 = sphi 0, %s20
      %s23 = sphi 0, %s21
      %s24 = sphi 0, %s22
      %s34 = sphi 0, %s36
      %s37 = sphi 0, %s34
      %s38 = sphi 0, %s37
      %s54 = sphi 0, %s38
      %s60 = sphi 0, %s62
      %s63 = sphi 0, %s60
      %s64 = sphi 0, %s63
      %s80 = sphi 0, %s64
      %s88 = sphi 0, %s90
      %s91 = sphi 0, %s88
      %s92 = sphi 0, %s91
      %s108 = sphi 0, %s92
      %s114 = sphi 0, %s116
      %s117 = sphi 0, %s114
      %s118 = sphi 0, %s117
      %s134 = sphi 0, %s118
    $region4: #{tpu_custom_call.1} parent=1 // loop_header_branch
      %15 = sbr.rel (%p13) target = $region8
    $region5: #{tpu_custom_call.1} parent=1 // loop_body
      %s17 = ssub.s32 %s12, 1
      %s18 = ssub.s32 %s12, 2
      %s25 = sadd.s32 1, %s20
      %p26 = scmp.ge.s32.totalorder %s25, 2
      %s27 = scalar_select %p26, 0, %s25
      %s28 = sadd.s32 1, %s19
      %s29 = scalar_select %p26, %s28, %s19
      %p30 = scmp.ge.s32.totalorder %s29, 2
      %s31 = scalar_select %p30, 0, %s29
      %s32 = ssub.s32 %s19, %s31
      %p33 = scmp.eq.s32.totalorder %s32, 0
      %s35 = sadd.s32 %s34, 1
      %s36 = scalar_select %p33, %s34, %s35
      %p39 = pneg %p33
      %p40 = scmp.eq.s32.totalorder %s12, 3
      %p41 = por %p39, %p40
      %p42 = scmp.ne.s32.totalorder %s34, %s37
      %p43 = scmp.eq.s32.totalorder %s12, 0
      %p44 = por %p42, %p43
      %p45 = scmp.ne.s32.totalorder %s34, %s37
      %p46 = scmp.eq.s32.totalorder %s17, 3
      %p47 = por %p45, %p46
      %p48 = scmp.ne.s32.totalorder %s37, %s38
      %p49 = scmp.eq.s32.totalorder %s17, 0
      %p50 = por %p48, %p49
      %p51 = scmp.ne.s32.totalorder %s37, %s38
      %p52 = scmp.eq.s32.totalorder %s18, 3
      %p53 = por %p51, %p52
      %p55 = scmp.ne.s32.totalorder %s38, %s54
      %p56 = scmp.eq.s32.totalorder %s18, 0
      %p57 = por %p55, %p56
      %s58 = ssub.s32 %s19, %s31
      %p59 = scmp.eq.s32.totalorder %s58, 0
      %s61 = sadd.s32 %s60, 1
      %s62 = scalar_select %p59, %s60, %s61
      %p65 = pneg %p59
      %p66 = scmp.eq.s32.totalorder %s12, 3
      %p67 = por %p65, %p66
      %p68 = scmp.ne.s32.totalorder %s60, %s63
      %p69 = scmp.eq.s32.totalorder %s12, 0
      %p70 = por %p68, %p69
      %p71 = scmp.ne.s32.totalorder %s60, %s63
      %p72 = scmp.eq.s32.totalorder %s17, 3
      %p73 = por %p71, %p72
      %p74 = scmp.ne.s32.totalorder %s63, %s64
      %p75 = scmp.eq.s32.totalorder %s17, 0
      %p76 = por %p74, %p75
      %p77 = scmp.ne.s32.totalorder %s63, %s64
      %p78 = scmp.eq.s32.totalorder %s18, 3
      %p79 = por %p77, %p78
      %p81 = scmp.ne.s32.totalorder %s64, %s80
      %p82 = scmp.eq.s32.totalorder %s18, 0
      %p83 = por %p81, %p82
      %s84 = ssub.s32 %s19, %s31
      %s85 = ssub.s32 %s20, %s27
      %s86 = sor.u32 %s84, %s85
      %p87 = scmp.eq.s32.totalorder %s86, 0
      %s89 = sadd.s32 %s88, 1
      %s90 = scalar_select %p87, %s88, %s89
      %p93 = pneg %p87
      %p94 = scmp.eq.s32.totalorder %s12, 3
      %p95 = por %p93, %p94
      %p96 = scmp.ne.s32.totalorder %s88, %s91
      %p97 = scmp.eq.s32.totalorder %s12, 0
      %p98 = por %p96, %p97
      %p99 = scmp.ne.s32.totalorder %s88, %s91
      %p100 = scmp.eq.s32.totalorder %s17, 3
      %p101 = por %p99, %p100
      %p102 = scmp.ne.s32.totalorder %s91, %s92
      %p103 = scmp.eq.s32.totalorder %s17, 0
      %p104 = por %p102, %p103
      %p105 = scmp.ne.s32.totalorder %s91, %s92
      %p106 = scmp.eq.s32.totalorder %s18, 3
      %p107 = por %p105, %p106
      %p109 = scmp.ne.s32.totalorder %s92, %s108
      %p110 = scmp.eq.s32.totalorder %s18, 0
      %p111 = por %p109, %p110
      %s112 = ssub.s32 %s19, %s31
      %p113 = scmp.eq.s32.totalorder %s112, 0
      %s115 = sadd.s32 %s114, 1
      %s116 = scalar_select %p113, %s114, %s115
      %p119 = pneg %p113
      %p120 = scmp.eq.s32.totalorder %s12, 3
      %p121 = por %p119, %p120
      %p122 = scmp.ne.s32.totalorder %s114, %s117
      %p123 = scmp.eq.s32.totalorder %s12, 0
      %p124 = por %p122, %p123
      %p125 = scmp.ne.s32.totalorder %s114, %s117
      %p126 = scmp.eq.s32.totalorder %s17, 3
      %p127 = por %p125, %p126
      %p128 = scmp.ne.s32.totalorder %s117, %s118
      %p129 = scmp.eq.s32.totalorder %s17, 0
      %p130 = por %p128, %p129
      %p131 = scmp.ne.s32.totalorder %s117, %s118
      %p132 = scmp.eq.s32.totalorder %s18, 3
      %p133 = por %p131, %p132
      %p135 = scmp.ne.s32.totalorder %s118, %s134
      %p136 = scmp.eq.s32.totalorder %s18, 0
      %p137 = por %p135, %p136
      %p138 = scmp.le.s32.totalorder 1, %s12
      %p139 = scmp.lt.s32.totalorder %s12, 5
      %p140 = pnand %p138, %p139
      %p141 = pneg %p140
      // Predicated region
      $region9: #{tpu_custom_call.1} parent=5 // pred_check
        _
      $region10: #{tpu_custom_call.1} parent=5 // pred_check_branch
        %143 = sbr.rel (%p140) target = $region12
      $region11: #{tpu_custom_call.1} parent=5 // pred_region
        %s144 = ssub.s32 %s12, 1
      $region12: #{tpu_custom_call.1} parent=5 // pred_fallthru
        _
      %p145 = scmp.lt.s32.totalorder %s12, 4
      // Predicated region
      $region13: #{tpu_custom_call.1} parent=5 // pred_check
        %p146 = pneg %p145
      $region14: #{tpu_custom_call.1} parent=5 // pred_check_branch
        %148 = sbr.rel (%p146) target = $region16
      $region15: #{tpu_custom_call.1} parent=5 // pred_region
        // Predicated region
        $region17: #{tpu_custom_call.1} parent=15 // pred_check
          %p149 = pneg %p44
        $region18: #{tpu_custom_call.1} parent=15 // pred_check_branch
          %151 = sbr.rel (%p149) target = $region20
        $region19: #{tpu_custom_call.1} parent=15 // pred_region
          %p152 = scmp.lt.s32.totalorder %s19, 1
          %s153 = scalar_select %p152, %s19, 1
          %s154 = smul.addr %s153, 8
          %s155 = scalar_lea.vmem %s0, %s154
        $region20: #{tpu_custom_call.1} parent=15 // pred_fallthru
          _
        // Predicated region
        $region21: #{tpu_custom_call.1} parent=15 // pred_check
          %p156 = pneg %p70
        $region22: #{tpu_custom_call.1} parent=15 // pred_check_branch
          %158 = sbr.rel (%p156) target = $region24
        $region23: #{tpu_custom_call.1} parent=15 // pred_region
          %p159 = scmp.lt.s32.totalorder %s19, 1
          %s160 = scalar_select %p159, %s19, 1
          %s161 = smul.addr %s160, 8
          %s162 = scalar_lea.vmem %s1, %s161
        $region24: #{tpu_custom_call.1} parent=15 // pred_fallthru
          _
        // Predicated region
        $region25: #{tpu_custom_call.1} parent=15 // pred_check
          %p163 = pneg %p98
        $region26: #{tpu_custom_call.1} parent=15 // pred_check_branch
          %165 = sbr.rel (%p163) target = $region28
        $region27: #{tpu_custom_call.1} parent=15 // pred_region
          #allocation6 [shape = 'u32[6]{0}', space=smem, size = 0x18, scoped, tag = 'DMA stride descriptor']
          %s166 = sand.u32 %s88, 1
          %s167 = scalar_lea.sflag [#allocation4], %s166
          %s168 = sand.u32 %s88, 1
          %s169 = smul.addr %s168, 128
          %s170 = scalar_lea.vmem [#allocation3], %s169
          %s171 = smul.u32 8, %s19
          %s172 = smul.u32 2, %s20
          %s174 = ssub.s32 2048, 2048
          %175 = vsyncadd %s167, %s174
          %s176 = smul.addr %s171, 4
          %s177 = sadd.s32 %s172, %s176
          %s178 = smul.addr %s177, 128
          %s179 = scalar_lea.hbm %s2, %s178
          %s181 = sshll.u32 1, 14
          %s182 = sxor.u32 4294967295, %s181
          %s184 = sld [smem:[#allocation0]]
          %s185 = sadd.s32 2, %s184
          %s187 = sshll.u32 7, 26
          %s188 = sxor.u32 4294967295, %s187
          %s189 = sand.u32 0, %s188
          %s190 = sshll.u32 %s185, 26
          %s191 = sor.u32 %s189, %s190
          %s192 = sshll.u32 %s170, 4
          %s193 = int_to_ptr.vmem [resolvable:$true] %s192
          %199 = sst [smem:[#allocation6]] 512
          %s200 = scalar_lea.smem [#allocation6], 1
          %201 = sst [smem:[%s200]] 256
          %s202 = scalar_lea.smem [#allocation6], 2
          %203 = sst [smem:[%s202]] 2
          %s204 = scalar_lea.smem [#allocation6], 3
          %205 = sst [smem:[%s204]] 128
          %s206 = scalar_lea.smem [#allocation6], 4
          %207 = sst [smem:[%s206]] 128
          %s208 = scalar_lea.smem [#allocation6], 5
          %209 = sst [smem:[%s208]] 8
          %211 = dma.general %s179, 2048, %s193, %s167, [#allocation5], [#allocation6], %s191, 0
        $region28: #{tpu_custom_call.1} parent=15 // pred_fallthru
          _
      $region16: #{tpu_custom_call.1} parent=5 // pred_fallthru
        _
      %p212 = scmp.le.s32.totalorder 1, %s12
      %p213 = scmp.lt.s32.totalorder %s12, 5
      %p214 = pnand %p212, %p213
      %p215 = pneg %p214
      // Predicated region
      $region29: #{tpu_custom_call.1} parent=5 // pred_check
        _
      $region30: #{tpu_custom_call.1} parent=5 // pred_check_branch
        %217 = sbr.rel (%p214) target = $region32
      $region31: #{tpu_custom_call.1} parent=5 // pred_region
        %s218 = ssub.s32 %s12, 1
        %s219 = sand.u32 %s91, 1
        %s220 = scalar_lea.sflag [#allocation4], %s219
        %s221 = sand.u32 %s91, 1
        %s222 = smul.addr %s221, 128
        %s223 = scalar_lea.vmem [#allocation3], %s222
        // Predicated region
        $region33: #{tpu_custom_call.1} parent=31 // pred_check
          %p224 = pneg %p104
        $region34: #{tpu_custom_call.1} parent=31 // pred_check_branch
          %226 = sbr.rel (%p224) target = $region36
        $region35: #{tpu_custom_call.1} parent=31 // pred_region
          %227 = dma.done %s220, 2048
        $region36: #{tpu_custom_call.1} parent=31 // pred_fallthru
          _
        %p228 = scmp.lt.s32.totalorder %s21, 1
        %s229 = scalar_select %p228, %s21, 1
        %s230 = smul.addr %s229, 8
        %s231 = scalar_lea.vmem %s0, %s230
        %p232 = pneg %p50
        %p233 = pneg %p47
        %p234 = scmp.lt.s32.totalorder %s21, 1
        %s235 = scalar_select %p234, %s21, 1
        %s236 = smul.addr %s235, 8
        %s237 = scalar_lea.vmem %s1, %s236
        %p238 = pneg %p76
        %p239 = pneg %p73
        %s240 = sand.u32 %s91, 1
        %s241 = scalar_lea.sflag [#allocation4], %s240
        %s242 = sand.u32 %s91, 1
        %s243 = smul.addr %s242, 128
        %s244 = scalar_lea.vmem [#allocation3], %s243
        %p245 = pneg %p104
        %p246 = pneg %p101
        %p247 = pneg %p130
        %p248 = pneg %p127
        %p249 = scmp.lt.s32.totalorder %s21, 1
        %s250 = scalar_select %p249, %s21, 1
        %s251 = smul.addr %s250, 8
        %s252 = scalar_lea.vmem %s3, %s251
        %p253 = scmp.lt.s32.totalorder %s21, 1
        %s254 = scalar_select %p253, %s21, 1
        %s255 = smul.addr %s254, 8
        %s256 = scalar_lea.vmem %s0, %s255
        %p257 = scmp.lt.s32.totalorder %s21, 1
        %s258 = scalar_select %p257, %s21, 1
        %s259 = smul.addr %s258, 8
        %s260 = scalar_lea.vmem %s1, %s259
        %s261 = smul.u32 8, %s21
        %s262 = smul.u32 2, %s22
        %p263 = scmp.lt.s32.totalorder %s21, 1
        %s264 = scalar_select %p263, %s21, 1
        %s265 = smul.addr %s264, 8
        %s266 = scalar_lea.vmem %s3, %s265
        %p267 = scmp.eq.s32.totalorder %s22, 0
        // Predicated region
        $region37: #{tpu_custom_call.1} parent=31 // pred_check
          %p268 = pneg %p267
        $region38: #{tpu_custom_call.1} parent=31 // pred_check_branch
          %270 = sbr.rel (%p268) target = $region40
        $region39: #{tpu_custom_call.1} parent=31 // pred_region
          %vm271 = vcmask 7168
          %272 = vst.msk [vmem:[#allocation2] sm:$0xff] %vm271, 0.0
        $region40: #{tpu_custom_call.1} parent=31 // pred_fallthru
          _
        %v273 = vld [vmem:[%s260] sm:$0xff]
        %v274 = vld [vmem:[%s223] sm:$0xff]
        %v275 = vld [vmem:[%s223 + $0x8] sm:$0xff]
        %v276 = vld [vmem:[%s223 + $0x10] sm:$0xff]
        %v277 = vld [vmem:[%s223 + $0x18] sm:$0xff]
        %v278 = vld [vmem:[%s223 + $0x20] sm:$0xff]
        %v279 = vld [vmem:[%s223 + $0x28] sm:$0xff]
        %v280 = vld [vmem:[%s223 + $0x30] sm:$0xff]
        %v281 = vld [vmem:[%s223 + $0x38] sm:$0xff]
        %v282 = vld [vmem:[%s223 + $0x40] sm:$0xff]
        %v283 = vld [vmem:[%s223 + $0x48] sm:$0xff]
        %v284 = vld [vmem:[%s223 + $0x50] sm:$0xff]
        %v285 = vld [vmem:[%s223 + $0x58] sm:$0xff]
        %v286 = vld [vmem:[%s223 + $0x60] sm:$0xff]
        %v287 = vld [vmem:[%s223 + $0x68] sm:$0xff]
        %v288 = vld [vmem:[%s223 + $0x70] sm:$0xff]
        %v289 = vld [vmem:[%s223 + $0x78] sm:$0xff]
        %v291 = vcombine.high %v273, %v273
        %v293 = vunpack.c.l.s4 1966171168
        %v294 = vunpack.c.0.s8 %v293
        %v295 = vlaneseq
        %v296 = vshrl.u32 %v295, 7
        %v297 = vsub.s32 %v294, %v296
        %v298 = vrot.slane %v273, %v297
        %v300 = vunpack.c.l.s4 1966171168
        %v301 = vunpack.c.0.s8 %v300
        %v302 = vlaneseq
        %v303 = vshrl.u32 %v302, 7
        %v304 = vsub.s32 %v301, %v303
        %v305 = vrot.slane %v291, %v304
        %v306 = vcombine.high %v298, %v298
        %v307 = vcombine.high %v305, %v305
        %v309 = vunpack.c.l.s4 1966171168
        %v310 = vunpack.c.0.s8 %v309
        %v311 = vlaneseq
        %v312 = vshrl.u32 %v311, 7
        %v313 = vsub.s32 %v310, %v312
        %v314 = vrot.slane %v298, %v313
        %v316 = vunpack.c.l.s4 1966171168
        %v317 = vunpack.c.0.s8 %v316
        %v318 = vlaneseq
        %v319 = vshrl.u32 %v318, 7
        %v320 = vsub.s32 %v317, %v319
        %v321 = vrot.slane %v305, %v320
        %v323 = vunpack.c.l.s4 1966171168
        %v324 = vunpack.c.0.s8 %v323
        %v325 = vlaneseq
        %v326 = vshrl.u32 %v325, 7
        %v327 = vsub.s32 %v324, %v326
        %v328 = vrot.slane %v306, %v327
        %v330 = vunpack.c.l.s4 1966171168
        %v331 = vunpack.c.0.s8 %v330
        %v332 = vlaneseq
        %v333 = vshrl.u32 %v332, 7
        %v334 = vsub.s32 %v331, %v333
        %v335 = vrot.slane %v307, %v334
        %v336 = vcombine.high %v314, %v314
        %v337 = vcombine.high %v321, %v321
        %v338 = vcombine.high %v328, %v328
        %v339 = vcombine.high %v335, %v335
        %v340 = vmul.f32 %v274, 0.1
        %v341 = vmul.f32 %v275, 0.1
        %v342 = vmul.f32 %v276, 0.1
        %v343 = vmul.f32 %v277, 0.1
        %v344 = vmul.f32 %v278, 0.1
        %v345 = vmul.f32 %v279, 0.1
        %v346 = vmul.f32 %v280, 0.1
        %v347 = vmul.f32 %v281, 0.1
        %v348 = vmul.f32 %v282, 0.1
        %v349 = vmul.f32 %v283, 0.1
        %v350 = vmul.f32 %v284, 0.1
        %v351 = vmul.f32 %v285, 0.1
        %v352 = vmul.f32 %v286, 0.1
        %v353 = vmul.f32 %v287, 0.1
        %v354 = vmul.f32 %v288, 0.1
        %v355 = vmul.f32 %v289, 0.1
        %v356 = vlaneseq
        %v357 = vshrl.u32 %v356, 7
        %v358 = vsub.s32 0, %v357
        %v359 = vrot.slane %v314, %v358
        %v360 = vlaneseq
        %v361 = vshrl.u32 %v360, 7
        %v362 = vsub.s32 0, %v361
        %v363 = vrot.slane %v328, %v362
        %v364 = vlaneseq
        %v365 = vshrl.u32 %v364, 7
        %v366 = vsub.s32 0, %v365
        %v367 = vrot.slane %v336, %v366
        %v368 = vlaneseq
        %v369 = vshrl.u32 %v368, 7
        %v370 = vsub.s32 0, %v369
        %v371 = vrot.slane %v338, %v370
        %v372 = vlaneseq
        %v373 = vshrl.u32 %v372, 7
        %v374 = vsub.s32 0, %v373
        %v375 = vrot.slane %v321, %v374
        %v376 = vlaneseq
        %v377 = vshrl.u32 %v376, 7
        %v378 = vsub.s32 0, %v377
        %v379 = vrot.slane %v335, %v378
        %v380 = vlaneseq
        %v381 = vshrl.u32 %v380, 7
        %v382 = vsub.s32 0, %v381
        %v383 = vrot.slane %v337, %v382
        %v384 = vlaneseq
        %v385 = vshrl.u32 %v384, 7
        %v386 = vsub.s32 0, %v385
        %v387 = vrot.slane %v339, %v386
        %v396 = vadd.f32 %v359, %v340
        %v397 = vadd.f32 %v359, %v341
        %v398 = vadd.f32 %v363, %v342
        %v399 = vadd.f32 %v363, %v343
        %v400 = vadd.f32 %v367, %v344
        %v401 = vadd.f32 %v367, %v345
        %v402 = vadd.f32 %v371, %v346
        %v403 = vadd.f32 %v371, %v347
        %v404 = vadd.f32 %v375, %v348
        %v405 = vadd.f32 %v375, %v349
        %v406 = vadd.f32 %v379, %v350
        %v407 = vadd.f32 %v379, %v351
        %v408 = vadd.f32 %v383, %v352
        %v409 = vadd.f32 %v383, %v353
        %v410 = vadd.f32 %v387, %v354
        %v411 = vadd.f32 %v387, %v355
        %v412 = vlaneseq
        %v413 = vand.u32 %v412, 127
        %vm414 = vcmask 261120
        %v415 = vsel %vm414, %v396, -inf
        %416 = vmax.xlane.f32.xlu0 %v415
        %v417 = vpop.xlane.xlu0 %416
        %v418 = vsel %vm414, %v397, -inf
        %419 = vmax.xlane.f32.xlu0 %v418
        %v420 = vpop.xlane.xlu0 %419
        %v421 = vsel %vm414, %v398, -inf
        %422 = vmax.xlane.f32.xlu0 %v421
        %v423 = vpop.xlane.xlu0 %422
        %v424 = vsel %vm414, %v399, -inf
        %425 = vmax.xlane.f32.xlu0 %v424
        %v426 = vpop.xlane.xlu0 %425
        %v427 = vsel %vm414, %v400, -inf
        %428 = vmax.xlane.f32.xlu0 %v427
        %v429 = vpop.xlane.xlu0 %428
        %v430 = vsel %vm414, %v401, -inf
        %431 = vmax.xlane.f32.xlu0 %v430
        %v432 = vpop.xlane.xlu0 %431
        %v433 = vsel %vm414, %v402, -inf
        %434 = vmax.xlane.f32.xlu0 %v433
        %v435 = vpop.xlane.xlu0 %434
        %v436 = vsel %vm414, %v403, -inf
        %437 = vmax.xlane.f32.xlu0 %v436
        %v438 = vpop.xlane.xlu0 %437
        %v439 = vsel %vm414, %v404, -inf
        %440 = vmax.xlane.f32.xlu0 %v439
        %v441 = vpop.xlane.xlu0 %440
        %v442 = vsel %vm414, %v405, -inf
        %443 = vmax.xlane.f32.xlu0 %v442
        %v444 = vpop.xlane.xlu0 %443
        %v445 = vsel %vm414, %v406, -inf
        %446 = vmax.xlane.f32.xlu0 %v445
        %v447 = vpop.xlane.xlu0 %446
        %v448 = vsel %vm414, %v407, -inf
        %449 = vmax.xlane.f32.xlu0 %v448
        %v450 = vpop.xlane.xlu0 %449
        %v451 = vsel %vm414, %v408, -inf
        %452 = vmax.xlane.f32.xlu0 %v451
        %v453 = vpop.xlane.xlu0 %452
        %v454 = vsel %vm414, %v409, -inf
        %455 = vmax.xlane.f32.xlu0 %v454
        %v456 = vpop.xlane.xlu0 %455
        %v457 = vsel %vm414, %v410, -inf
        %458 = vmax.xlane.f32.xlu0 %v457
        %v459 = vpop.xlane.xlu0 %458
        %v460 = vsel %vm414, %v411, -inf
        %461 = vmax.xlane.f32.xlu0 %v460
        %v462 = vpop.xlane.xlu0 %461
        %vm463 = vcmp.eq.f32.partialorder %v396, %v417
        %vm464 = vcmp.eq.f32.partialorder %v397, %v420
        %vm465 = vcmp.eq.f32.partialorder %v398, %v423
        %vm466 = vcmp.eq.f32.partialorder %v399, %v426
        %vm467 = vcmp.eq.f32.partialorder %v400, %v429
        %vm468 = vcmp.eq.f32.partialorder %v401, %v432
        %vm469 = vcmp.eq.f32.partialorder %v402, %v435
        %vm470 = vcmp.eq.f32.partialorder %v403, %v438
        %vm471 = vcmp.eq.f32.partialorder %v404, %v441
        %vm472 = vcmp.eq.f32.partialorder %v405, %v444
        %vm473 = vcmp.eq.f32.partialorder %v406, %v447
        %vm474 = vcmp.eq.f32.partialorder %v407, %v450
        %vm475 = vcmp.eq.f32.partialorder %v408, %v453
        %vm476 = vcmp.eq.f32.partialorder %v409, %v456
        %vm477 = vcmp.eq.f32.partialorder %v410, %v459
        %vm478 = vcmp.eq.f32.partialorder %v411, %v462
        %v479 = vsel %vm463, %v413, 32
        %v480 = vsel %vm464, %v413, 32
        %v481 = vsel %vm465, %v413, 32
        %v482 = vsel %vm466, %v413, 32
        %v483 = vsel %vm467, %v413, 32
        %v484 = vsel %vm468, %v413, 32
        %v485 = vsel %vm469, %v413, 32
        %v486 = vsel %vm470, %v413, 32
        %v487 = vsel %vm471, %v413, 32
        %v488 = vsel %vm472, %v413, 32
        %v489 = vsel %vm473, %v413, 32
        %v490 = vsel %vm474, %v413, 32
        %v491 = vsel %vm475, %v413, 32
        %v492 = vsel %vm476, %v413, 32
        %v493 = vsel %vm477, %v413, 32
        %v494 = vsel %vm478, %v413, 32
        %v495 = vsel %vm414, %v479, 2147483647
        %v496 = vand.u32 %v495, 65535
        %v497 = vshra.s32 %v495, 16
        %v498 = vcvt.s32.f32 %v496
        %v499 = vcvt.s32.f32 %v497
        %500 = vmin.xlane.f32.xlu0 %v499
        %v501 = vpop.xlane.xlu0 %500
        %vm502 = vcmp.eq.f32.partialorder %v499, %v501
        %v503 = vsel %vm502, %v498, inf
        %504 = vmin.xlane.f32.xlu0 %v503
        %v505 = vpop.xlane.xlu0 %504
        %v506 = vcvt.f32.s32 %v505
        %v507 = vcvt.f32.s32 %v501
        %v508 = vshll.u32 %v507, 16
        %v509 = vadd.s32 %v508, %v506
        %v510 = vsel %vm414, %v480, 2147483647
        %v511 = vand.u32 %v510, 65535
        %v512 = vshra.s32 %v510, 16
        %v513 = vcvt.s32.f32 %v511
        %v514 = vcvt.s32.f32 %v512
        %515 = vmin.xlane.f32.xlu0 %v514
        %v516 = vpop.xlane.xlu0 %515
        %vm517 = vcmp.eq.f32.partialorder %v514, %v516
        %v518 = vsel %vm517, %v513, inf
        %519 = vmin.xlane.f32.xlu0 %v518
        %v520 = vpop.xlane.xlu0 %519
        %v521 = vcvt.f32.s32 %v520
        %v522 = vcvt.f32.s32 %v516
        %v523 = vshll.u32 %v522, 16
        %v524 = vadd.s32 %v523, %v521
        %v525 = vsel %vm414, %v481, 2147483647
        %v526 = vand.u32 %v525, 65535
        %v527 = vshra.s32 %v525, 16
        %v528 = vcvt.s32.f32 %v526
        %v529 = vcvt.s32.f32 %v527
        %530 = vmin.xlane.f32.xlu0 %v529
        %v531 = vpop.xlane.xlu0 %530
        %vm532 = vcmp.eq.f32.partialorder %v529, %v531
        %v533 = vsel %vm532, %v528, inf
        %534 = vmin.xlane.f32.xlu0 %v533
        %v535 = vpop.xlane.xlu0 %534
        %v536 = vcvt.f32.s32 %v535
        %v537 = vcvt.f32.s32 %v531
        %v538 = vshll.u32 %v537, 16
        %v539 = vadd.s32 %v538, %v536
        %v540 = vsel %vm414, %v482, 2147483647
        %v541 = vand.u32 %v540, 65535
        %v542 = vshra.s32 %v540, 16
        %v543 = vcvt.s32.f32 %v541
        %v544 = vcvt.s32.f32 %v542
        %545 = vmin.xlane.f32.xlu0 %v544
        %v546 = vpop.xlane.xlu0 %545
        %vm547 = vcmp.eq.f32.partialorder %v544, %v546
        %v548 = vsel %vm547, %v543, inf
        %549 = vmin.xlane.f32.xlu0 %v548
        %v550 = vpop.xlane.xlu0 %549
        %v551 = vcvt.f32.s32 %v550
        %v552 = vcvt.f32.s32 %v546
        %v553 = vshll.u32 %v552, 16
        %v554 = vadd.s32 %v553, %v551
        %v555 = vsel %vm414, %v483, 2147483647
        %v556 = vand.u32 %v555, 65535
        %v557 = vshra.s32 %v555, 16
        %v558 = vcvt.s32.f32 %v556
        %v559 = vcvt.s32.f32 %v557
        %560 = vmin.xlane.f32.xlu0 %v559
        %v561 = vpop.xlane.xlu0 %560
        %vm562 = vcmp.eq.f32.partialorder %v559, %v561
        %v563 = vsel %vm562, %v558, inf
        %564 = vmin.xlane.f32.xlu0 %v563
        %v565 = vpop.xlane.xlu0 %564
        %v566 = vcvt.f32.s32 %v565
        %v567 = vcvt.f32.s32 %v561
        %v568 = vshll.u32 %v567, 16
        %v569 = vadd.s32 %v568, %v566
        %v570 = vsel %vm414, %v484, 2147483647
        %v571 = vand.u32 %v570, 65535
        %v572 = vshra.s32 %v570, 16
        %v573 = vcvt.s32.f32 %v571
        %v574 = vcvt.s32.f32 %v572
        %575 = vmin.xlane.f32.xlu0 %v574
        %v576 = vpop.xlane.xlu0 %575
        %vm577 = vcmp.eq.f32.partialorder %v574, %v576
        %v578 = vsel %vm577, %v573, inf
        %579 = vmin.xlane.f32.xlu0 %v578
        %v580 = vpop.xlane.xlu0 %579
        %v581 = vcvt.f32.s32 %v580
        %v582 = vcvt.f32.s32 %v576
        %v583 = vshll.u32 %v582, 16
        %v584 = vadd.s32 %v583, %v581
        %v585 = vsel %vm414, %v485, 2147483647
        %v586 = vand.u32 %v585, 65535
        %v587 = vshra.s32 %v585, 16
        %v588 = vcvt.s32.f32 %v586
        %v589 = vcvt.s32.f32 %v587
        %590 = vmin.xlane.f32.xlu0 %v589
        %v591 = vpop.xlane.xlu0 %590
        %vm592 = vcmp.eq.f32.partialorder %v589, %v591
        %v593 = vsel %vm592, %v588, inf
        %594 = vmin.xlane.f32.xlu0 %v593
        %v595 = vpop.xlane.xlu0 %594
        %v596 = vcvt.f32.s32 %v595
        %v597 = vcvt.f32.s32 %v591
        %v598 = vshll.u32 %v597, 16
        %v599 = vadd.s32 %v598, %v596
        %v600 = vsel %vm414, %v486, 2147483647
        %v601 = vand.u32 %v600, 65535
        %v602 = vshra.s32 %v600, 16
        %v603 = vcvt.s32.f32 %v601
        %v604 = vcvt.s32.f32 %v602
        %605 = vmin.xlane.f32.xlu0 %v604
        %v606 = vpop.xlane.xlu0 %605
        %vm607 = vcmp.eq.f32.partialorder %v604, %v606
        %v608 = vsel %vm607, %v603, inf
        %609 = vmin.xlane.f32.xlu0 %v608
        %v610 = vpop.xlane.xlu0 %609
        %v611 = vcvt.f32.s32 %v610
        %v612 = vcvt.f32.s32 %v606
        %v613 = vshll.u32 %v612, 16
        %v614 = vadd.s32 %v613, %v611
        %v615 = vsel %vm414, %v487, 2147483647
        %v616 = vand.u32 %v615, 65535
        %v617 = vshra.s32 %v615, 16
        %v618 = vcvt.s32.f32 %v616
        %v619 = vcvt.s32.f32 %v617
        %620 = vmin.xlane.f32.xlu0 %v619
        %v621 = vpop.xlane.xlu0 %620
        %vm622 = vcmp.eq.f32.partialorder %v619, %v621
        %v623 = vsel %vm622, %v618, inf
        %624 = vmin.xlane.f32.xlu0 %v623
        %v625 = vpop.xlane.xlu0 %624
        %v626 = vcvt.f32.s32 %v625
        %v627 = vcvt.f32.s32 %v621
        %v628 = vshll.u32 %v627, 16
        %v629 = vadd.s32 %v628, %v626
        %v630 = vsel %vm414, %v488, 2147483647
        %v631 = vand.u32 %v630, 65535
        %v632 = vshra.s32 %v630, 16
        %v633 = vcvt.s32.f32 %v631
        %v634 = vcvt.s32.f32 %v632
        %635 = vmin.xlane.f32.xlu0 %v634
        %v636 = vpop.xlane.xlu0 %635
        %vm637 = vcmp.eq.f32.partialorder %v634, %v636
        %v638 = vsel %vm637, %v633, inf
        %639 = vmin.xlane.f32.xlu0 %v638
        %v640 = vpop.xlane.xlu0 %639
        %v641 = vcvt.f32.s32 %v640
        %v642 = vcvt.f32.s32 %v636
        %v643 = vshll.u32 %v642, 16
        %v644 = vadd.s32 %v643, %v641
        %v645 = vsel %vm414, %v489, 2147483647
        %v646 = vand.u32 %v645, 65535
        %v647 = vshra.s32 %v645, 16
        %v648 = vcvt.s32.f32 %v646
        %v649 = vcvt.s32.f32 %v647
        %650 = vmin.xlane.f32.xlu0 %v649
        %v651 = vpop.xlane.xlu0 %650
        %vm652 = vcmp.eq.f32.partialorder %v649, %v651
        %v653 = vsel %vm652, %v648, inf
        %654 = vmin.xlane.f32.xlu0 %v653
        %v655 = vpop.xlane.xlu0 %654
        %v656 = vcvt.f32.s32 %v655
        %v657 = vcvt.f32.s32 %v651
        %v658 = vshll.u32 %v657, 16
        %v659 = vadd.s32 %v658, %v656
        %v660 = vsel %vm414, %v490, 2147483647
        %v661 = vand.u32 %v660, 65535
        %v662 = vshra.s32 %v660, 16
        %v663 = vcvt.s32.f32 %v661
        %v664 = vcvt.s32.f32 %v662
        %665 = vmin.xlane.f32.xlu0 %v664
        %v666 = vpop.xlane.xlu0 %665
        %vm667 = vcmp.eq.f32.partialorder %v664, %v666
        %v668 = vsel %vm667, %v663, inf
        %669 = vmin.xlane.f32.xlu0 %v668
        %v670 = vpop.xlane.xlu0 %669
        %v671 = vcvt.f32.s32 %v670
        %v672 = vcvt.f32.s32 %v666
        %v673 = vshll.u32 %v672, 16
        %v674 = vadd.s32 %v673, %v671
        %v675 = vsel %vm414, %v491, 2147483647
        %v676 = vand.u32 %v675, 65535
        %v677 = vshra.s32 %v675, 16
        %v678 = vcvt.s32.f32 %v676
        %v679 = vcvt.s32.f32 %v677
        %680 = vmin.xlane.f32.xlu0 %v679
        %v681 = vpop.xlane.xlu0 %680
        %vm682 = vcmp.eq.f32.partialorder %v679, %v681
        %v683 = vsel %vm682, %v678, inf
        %684 = vmin.xlane.f32.xlu0 %v683
        %v685 = vpop.xlane.xlu0 %684
        %v686 = vcvt.f32.s32 %v685
        %v687 = vcvt.f32.s32 %v681
        %v688 = vshll.u32 %v687, 16
        %v689 = vadd.s32 %v688, %v686
        %v690 = vsel %vm414, %v492, 2147483647
        %v691 = vand.u32 %v690, 65535
        %v692 = vshra.s32 %v690, 16
        %v693 = vcvt.s32.f32 %v691
        %v694 = vcvt.s32.f32 %v692
        %695 = vmin.xlane.f32.xlu0 %v694
        %v696 = vpop.xlane.xlu0 %695
        %vm697 = vcmp.eq.f32.partialorder %v694, %v696
        %v698 = vsel %vm697, %v693, inf
        %699 = vmin.xlane.f32.xlu0 %v698
        %v700 = vpop.xlane.xlu0 %699
        %v701 = vcvt.f32.s32 %v700
        %v702 = vcvt.f32.s32 %v696
        %v703 = vshll.u32 %v702, 16
        %v704 = vadd.s32 %v703, %v701
        %v705 = vsel %vm414, %v493, 2147483647
        %v706 = vand.u32 %v705, 65535
        %v707 = vshra.s32 %v705, 16
        %v708 = vcvt.s32.f32 %v706
        %v709 = vcvt.s32.f32 %v707
        %710 = vmin.xlane.f32.xlu0 %v709
        %v711 = vpop.xlane.xlu0 %710
        %vm712 = vcmp.eq.f32.partialorder %v709, %v711
        %v713 = vsel %vm712, %v708, inf
        %714 = vmin.xlane.f32.xlu0 %v713
        %v715 = vpop.xlane.xlu0 %714
        %v716 = vcvt.f32.s32 %v715
        %v717 = vcvt.f32.s32 %v711
        %v718 = vshll.u32 %v717, 16
        %v719 = vadd.s32 %v718, %v716
        %v720 = vsel %vm414, %v494, 2147483647
        %v721 = vand.u32 %v720, 65535
        %v722 = vshra.s32 %v720, 16
        %v723 = vcvt.s32.f32 %v721
        %v724 = vcvt.s32.f32 %v722
        %725 = vmin.xlane.f32.xlu0 %v724
        %v726 = vpop.xlane.xlu0 %725
        %vm727 = vcmp.eq.f32.partialorder %v724, %v726
        %v728 = vsel %vm727, %v723, inf
        %729 = vmin.xlane.f32.xlu0 %v728
        %v730 = vpop.xlane.xlu0 %729
        %v731 = vcvt.f32.s32 %v730
        %v732 = vcvt.f32.s32 %v726
        %v733 = vshll.u32 %v732, 16
        %v734 = vadd.s32 %v733, %v731
        %vm735 = vcmp.eq.s32.totalorder %v413, %v509
        %vm736 = vcmp.eq.s32.totalorder %v413, %v524
        %vm737 = vcmp.eq.s32.totalorder %v413, %v539
        %vm738 = vcmp.eq.s32.totalorder %v413, %v554
        %vm739 = vcmp.eq.s32.totalorder %v413, %v569
        %vm740 = vcmp.eq.s32.totalorder %v413, %v584
        %vm741 = vcmp.eq.s32.totalorder %v413, %v599
        %vm742 = vcmp.eq.s32.totalorder %v413, %v614
        %vm743 = vcmp.eq.s32.totalorder %v413, %v629
        %vm744 = vcmp.eq.s32.totalorder %v413, %v644
        %vm745 = vcmp.eq.s32.totalorder %v413, %v659
        %vm746 = vcmp.eq.s32.totalorder %v413, %v674
        %vm747 = vcmp.eq.s32.totalorder %v413, %v689
        %vm748 = vcmp.eq.s32.totalorder %v413, %v704
        %vm749 = vcmp.eq.s32.totalorder %v413, %v719
        %vm750 = vcmp.eq.s32.totalorder %v413, %v734
        %v751 = vsel %vm735, -inf, %v396
        %v752 = vsel %vm736, -inf, %v397
        %v753 = vsel %vm737, -inf, %v398
        %v754 = vsel %vm738, -inf, %v399
        %v755 = vsel %vm739, -inf, %v400
        %v756 = vsel %vm740, -inf, %v401
        %v757 = vsel %vm741, -inf, %v402
        %v758 = vsel %vm742, -inf, %v403
        %v759 = vsel %vm743, -inf, %v404
        %v760 = vsel %vm744, -inf, %v405
        %v761 = vsel %vm745, -inf, %v406
        %v762 = vsel %vm746, -inf, %v407
        %v763 = vsel %vm747, -inf, %v408
        %v764 = vsel %vm748, -inf, %v409
        %v765 = vsel %vm749, -inf, %v410
        %v766 = vsel %vm750, -inf, %v411
        %v767 = vsel %vm414, %v751, -inf
        %768 = vmax.xlane.f32.xlu0 %v767
        %v769 = vpop.xlane.xlu0 %768
        %v770 = vsel %vm414, %v752, -inf
        %771 = vmax.xlane.f32.xlu0 %v770
        %v772 = vpop.xlane.xlu0 %771
        %v773 = vsel %vm414, %v753, -inf
        %774 = vmax.xlane.f32.xlu0 %v773
        %v775 = vpop.xlane.xlu0 %774
        %v776 = vsel %vm414, %v754, -inf
        %777 = vmax.xlane.f32.xlu0 %v776
        %v778 = vpop.xlane.xlu0 %777
        %v779 = vsel %vm414, %v755, -inf
        %780 = vmax.xlane.f32.xlu0 %v779
        %v781 = vpop.xlane.xlu0 %780
        %v782 = vsel %vm414, %v756, -inf
        %783 = vmax.xlane.f32.xlu0 %v782
        %v784 = vpop.xlane.xlu0 %783
        %v785 = vsel %vm414, %v757, -inf
        %786 = vmax.xlane.f32.xlu0 %v785
        %v787 = vpop.xlane.xlu0 %786
        %v788 = vsel %vm414, %v758, -inf
        %789 = vmax.xlane.f32.xlu0 %v788
        %v790 = vpop.xlane.xlu0 %789
        %v791 = vsel %vm414, %v759, -inf
        %792 = vmax.xlane.f32.xlu0 %v791
        %v793 = vpop.xlane.xlu0 %792
        %v794 = vsel %vm414, %v760, -inf
        %795 = vmax.xlane.f32.xlu0 %v794
        %v796 = vpop.xlane.xlu0 %795
        %v797 = vsel %vm414, %v761, -inf
        %798 = vmax.xlane.f32.xlu0 %v797
        %v799 = vpop.xlane.xlu0 %798
        %v800 = vsel %vm414, %v762, -inf
        %801 = vmax.xlane.f32.xlu0 %v800
        %v802 = vpop.xlane.xlu0 %801
        %v803 = vsel %vm414, %v763, -inf
        %804 = vmax.xlane.f32.xlu0 %v803
        %v805 = vpop.xlane.xlu0 %804
        %v806 = vsel %vm414, %v764, -inf
        %807 = vmax.xlane.f32.xlu0 %v806
        %v808 = vpop.xlane.xlu0 %807
        %v809 = vsel %vm414, %v765, -inf
        %810 = vmax.xlane.f32.xlu0 %v809
        %v811 = vpop.xlane.xlu0 %810
        %v812 = vsel %vm414, %v766, -inf
        %813 = vmax.xlane.f32.xlu0 %v812
        %v814 = vpop.xlane.xlu0 %813
        %vm815 = vcmp.eq.f32.partialorder %v751, %v769
        %vm816 = vcmp.eq.f32.partialorder %v752, %v772
        %vm817 = vcmp.eq.f32.partialorder %v753, %v775
        %vm818 = vcmp.eq.f32.partialorder %v754, %v778
        %vm819 = vcmp.eq.f32.partialorder %v755, %v781
        %vm820 = vcmp.eq.f32.partialorder %v756, %v784
        %vm821 = vcmp.eq.f32.partialorder %v757, %v787
        %vm822 = vcmp.eq.f32.partialorder %v758, %v790
        %vm823 = vcmp.eq.f32.partialorder %v759, %v793
        %vm824 = vcmp.eq.f32.partialorder %v760, %v796
        %vm825 = vcmp.eq.f32.partialorder %v761, %v799
        %vm826 = vcmp.eq.f32.partialorder %v762, %v802
        %vm827 = vcmp.eq.f32.partialorder %v763, %v805
        %vm828 = vcmp.eq.f32.partialorder %v764, %v808
        %vm829 = vcmp.eq.f32.partialorder %v765, %v811
        %vm830 = vcmp.eq.f32.partialorder %v766, %v814
        %v831 = vsel %vm815, %v413, 32
        %v832 = vsel %vm816, %v413, 32
        %v833 = vsel %vm817, %v413, 32
        %v834 = vsel %vm818, %v413, 32
        %v835 = vsel %vm819, %v413, 32
        %v836 = vsel %vm820, %v413, 32
        %v837 = vsel %vm821, %v413, 32
        %v838 = vsel %vm822, %v413, 32
        %v839 = vsel %vm823, %v413, 32
        %v840 = vsel %vm824, %v413, 32
        %v841 = vsel %vm825, %v413, 32
        %v842 = vsel %vm826, %v413, 32
        %v843 = vsel %vm827, %v413, 32
        %v844 = vsel %vm828, %v413, 32
        %v845 = vsel %vm829, %v413, 32
        %v846 = vsel %vm830, %v413, 32
        %v847 = vsel %vm414, %v831, 2147483647
        %v848 = vand.u32 %v847, 65535
        %v849 = vshra.s32 %v847, 16
        %v850 = vcvt.s32.f32 %v848
        %v851 = vcvt.s32.f32 %v849
        %852 = vmin.xlane.f32.xlu0 %v851
        %v853 = vpop.xlane.xlu0 %852
        %vm854 = vcmp.eq.f32.partialorder %v851, %v853
        %v855 = vsel %vm854, %v850, inf
        %856 = vmin.xlane.f32.xlu0 %v855
        %v857 = vpop.xlane.xlu0 %856
        %v858 = vcvt.f32.s32 %v857
        %v859 = vcvt.f32.s32 %v853
        %v860 = vshll.u32 %v859, 16
        %v861 = vadd.s32 %v860, %v858
        %v862 = vsel %vm414, %v832, 2147483647
        %v863 = vand.u32 %v862, 65535
        %v864 = vshra.s32 %v862, 16
        %v865 = vcvt.s32.f32 %v863
        %v866 = vcvt.s32.f32 %v864
        %867 = vmin.xlane.f32.xlu0 %v866
        %v868 = vpop.xlane.xlu0 %867
        %vm869 = vcmp.eq.f32.partialorder %v866, %v868
        %v870 = vsel %vm869, %v865, inf
        %871 = vmin.xlane.f32.xlu0 %v870
        %v872 = vpop.xlane.xlu0 %871
        %v873 = vcvt.f32.s32 %v872
        %v874 = vcvt.f32.s32 %v868
        %v875 = vshll.u32 %v874, 16
        %v876 = vadd.s32 %v875, %v873
        %v877 = vsel %vm414, %v833, 2147483647
        %v878 = vand.u32 %v877, 65535
        %v879 = vshra.s32 %v877, 16
        %v880 = vcvt.s32.f32 %v878
        %v881 = vcvt.s32.f32 %v879
        %882 = vmin.xlane.f32.xlu0 %v881
        %v883 = vpop.xlane.xlu0 %882
        %vm884 = vcmp.eq.f32.partialorder %v881, %v883
        %v885 = vsel %vm884, %v880, inf
        %886 = vmin.xlane.f32.xlu0 %v885
        %v887 = vpop.xlane.xlu0 %886
        %v888 = vcvt.f32.s32 %v887
        %v889 = vcvt.f32.s32 %v883
        %v890 = vshll.u32 %v889, 16
        %v891 = vadd.s32 %v890, %v888
        %v892 = vsel %vm414, %v834, 2147483647
        %v893 = vand.u32 %v892, 65535
        %v894 = vshra.s32 %v892, 16
        %v895 = vcvt.s32.f32 %v893
        %v896 = vcvt.s32.f32 %v894
        %897 = vmin.xlane.f32.xlu0 %v896
        %v898 = vpop.xlane.xlu0 %897
        %vm899 = vcmp.eq.f32.partialorder %v896, %v898
        %v900 = vsel %vm899, %v895, inf
        %901 = vmin.xlane.f32.xlu0 %v900
        %v902 = vpop.xlane.xlu0 %901
        %v903 = vcvt.f32.s32 %v902
        %v904 = vcvt.f32.s32 %v898
        %v905 = vshll.u32 %v904, 16
        %v906 = vadd.s32 %v905, %v903
        %v907 = vsel %vm414, %v835, 2147483647
        %v908 = vand.u32 %v907, 65535
        %v909 = vshra.s32 %v907, 16
        %v910 = vcvt.s32.f32 %v908
        %v911 = vcvt.s32.f32 %v909
        %912 = vmin.xlane.f32.xlu0 %v911
        %v913 = vpop.xlane.xlu0 %912
        %vm914 = vcmp.eq.f32.partialorder %v911, %v913
        %v915 = vsel %vm914, %v910, inf
        %916 = vmin.xlane.f32.xlu0 %v915
        %v917 = vpop.xlane.xlu0 %916
        %v918 = vcvt.f32.s32 %v917
        %v919 = vcvt.f32.s32 %v913
        %v920 = vshll.u32 %v919, 16
        %v921 = vadd.s32 %v920, %v918
        %v922 = vsel %vm414, %v836, 2147483647
        %v923 = vand.u32 %v922, 65535
        %v924 = vshra.s32 %v922, 16
        %v925 = vcvt.s32.f32 %v923
        %v926 = vcvt.s32.f32 %v924
        %927 = vmin.xlane.f32.xlu0 %v926
        %v928 = vpop.xlane.xlu0 %927
        %vm929 = vcmp.eq.f32.partialorder %v926, %v928
        %v930 = vsel %vm929, %v925, inf
        %931 = vmin.xlane.f32.xlu0 %v930
        %v932 = vpop.xlane.xlu0 %931
        %v933 = vcvt.f32.s32 %v932
        %v934 = vcvt.f32.s32 %v928
        %v935 = vshll.u32 %v934, 16
        %v936 = vadd.s32 %v935, %v933
        %v937 = vsel %vm414, %v837, 2147483647
        %v938 = vand.u32 %v937, 65535
        %v939 = vshra.s32 %v937, 16
        %v940 = vcvt.s32.f32 %v938
        %v941 = vcvt.s32.f32 %v939
        %942 = vmin.xlane.f32.xlu0 %v941
        %v943 = vpop.xlane.xlu0 %942
        %vm944 = vcmp.eq.f32.partialorder %v941, %v943
        %v945 = vsel %vm944, %v940, inf
        %946 = vmin.xlane.f32.xlu0 %v945
        %v947 = vpop.xlane.xlu0 %946
        %v948 = vcvt.f32.s32 %v947
        %v949 = vcvt.f32.s32 %v943
        %v950 = vshll.u32 %v949, 16
        %v951 = vadd.s32 %v950, %v948
        %v952 = vsel %vm414, %v838, 2147483647
        %v953 = vand.u32 %v952, 65535
        %v954 = vshra.s32 %v952, 16
        %v955 = vcvt.s32.f32 %v953
        %v956 = vcvt.s32.f32 %v954
        %957 = vmin.xlane.f32.xlu0 %v956
        %v958 = vpop.xlane.xlu0 %957
        %vm959 = vcmp.eq.f32.partialorder %v956, %v958
        %v960 = vsel %vm959, %v955, inf
        %961 = vmin.xlane.f32.xlu0 %v960
        %v962 = vpop.xlane.xlu0 %961
        %v963 = vcvt.f32.s32 %v962
        %v964 = vcvt.f32.s32 %v958
        %v965 = vshll.u32 %v964, 16
        %v966 = vadd.s32 %v965, %v963
        %v967 = vsel %vm414, %v839, 2147483647
        %v968 = vand.u32 %v967, 65535
        %v969 = vshra.s32 %v967, 16
        %v970 = vcvt.s32.f32 %v968
        %v971 = vcvt.s32.f32 %v969
        %972 = vmin.xlane.f32.xlu0 %v971
        %v973 = vpop.xlane.xlu0 %972
        %vm974 = vcmp.eq.f32.partialorder %v971, %v973
        %v975 = vsel %vm974, %v970, inf
        %976 = vmin.xlane.f32.xlu0 %v975
        %v977 = vpop.xlane.xlu0 %976
        %v978 = vcvt.f32.s32 %v977
        %v979 = vcvt.f32.s32 %v973
        %v980 = vshll.u32 %v979, 16
        %v981 = vadd.s32 %v980, %v978
        %v982 = vsel %vm414, %v840, 2147483647
        %v983 = vand.u32 %v982, 65535
        %v984 = vshra.s32 %v982, 16
        %v985 = vcvt.s32.f32 %v983
        %v986 = vcvt.s32.f32 %v984
        %987 = vmin.xlane.f32.xlu0 %v986
        %v988 = vpop.xlane.xlu0 %987
        %vm989 = vcmp.eq.f32.partialorder %v986, %v988
        %v990 = vsel %vm989, %v985, inf
        %991 = vmin.xlane.f32.xlu0 %v990
        %v992 = vpop.xlane.xlu0 %991
        %v993 = vcvt.f32.s32 %v992
        %v994 = vcvt.f32.s32 %v988
        %v995 = vshll.u32 %v994, 16
        %v996 = vadd.s32 %v995, %v993
        %v997 = vsel %vm414, %v841, 2147483647
        %v998 = vand.u32 %v997, 65535
        %v999 = vshra.s32 %v997, 16
        %v1000 = vcvt.s32.f32 %v998
        %v1001 = vcvt.s32.f32 %v999
        %1002 = vmin.xlane.f32.xlu0 %v1001
        %v1003 = vpop.xlane.xlu0 %1002
        %vm1004 = vcmp.eq.f32.partialorder %v1001, %v1003
        %v1005 = vsel %vm1004, %v1000, inf
        %1006 = vmin.xlane.f32.xlu0 %v1005
        %v1007 = vpop.xlane.xlu0 %1006
        %v1008 = vcvt.f32.s32 %v1007
        %v1009 = vcvt.f32.s32 %v1003
        %v1010 = vshll.u32 %v1009, 16
        %v1011 = vadd.s32 %v1010, %v1008
        %v1012 = vsel %vm414, %v842, 2147483647
        %v1013 = vand.u32 %v1012, 65535
        %v1014 = vshra.s32 %v1012, 16
        %v1015 = vcvt.s32.f32 %v1013
        %v1016 = vcvt.s32.f32 %v1014
        %1017 = vmin.xlane.f32.xlu0 %v1016
        %v1018 = vpop.xlane.xlu0 %1017
        %vm1019 = vcmp.eq.f32.partialorder %v1016, %v1018
        %v1020 = vsel %vm1019, %v1015, inf
        %1021 = vmin.xlane.f32.xlu0 %v1020
        %v1022 = vpop.xlane.xlu0 %1021
        %v1023 = vcvt.f32.s32 %v1022
        %v1024 = vcvt.f32.s32 %v1018
        %v1025 = vshll.u32 %v1024, 16
        %v1026 = vadd.s32 %v1025, %v1023
        %v1027 = vsel %vm414, %v843, 2147483647
        %v1028 = vand.u32 %v1027, 65535
        %v1029 = vshra.s32 %v1027, 16
        %v1030 = vcvt.s32.f32 %v1028
        %v1031 = vcvt.s32.f32 %v1029
        %1032 = vmin.xlane.f32.xlu0 %v1031
        %v1033 = vpop.xlane.xlu0 %1032
        %vm1034 = vcmp.eq.f32.partialorder %v1031, %v1033
        %v1035 = vsel %vm1034, %v1030, inf
        %1036 = vmin.xlane.f32.xlu0 %v1035
        %v1037 = vpop.xlane.xlu0 %1036
        %v1038 = vcvt.f32.s32 %v1037
        %v1039 = vcvt.f32.s32 %v1033
        %v1040 = vshll.u32 %v1039, 16
        %v1041 = vadd.s32 %v1040, %v1038
        %v1042 = vsel %vm414, %v844, 2147483647
        %v1043 = vand.u32 %v1042, 65535
        %v1044 = vshra.s32 %v1042, 16
        %v1045 = vcvt.s32.f32 %v1043
        %v1046 = vcvt.s32.f32 %v1044
        %1047 = vmin.xlane.f32.xlu0 %v1046
        %v1048 = vpop.xlane.xlu0 %1047
        %vm1049 = vcmp.eq.f32.partialorder %v1046, %v1048
        %v1050 = vsel %vm1049, %v1045, inf
        %1051 = vmin.xlane.f32.xlu0 %v1050
        %v1052 = vpop.xlane.xlu0 %1051
        %v1053 = vcvt.f32.s32 %v1052
        %v1054 = vcvt.f32.s32 %v1048
        %v1055 = vshll.u32 %v1054, 16
        %v1056 = vadd.s32 %v1055, %v1053
        %v1057 = vsel %vm414, %v845, 2147483647
        %v1058 = vand.u32 %v1057, 65535
        %v1059 = vshra.s32 %v1057, 16
        %v1060 = vcvt.s32.f32 %v1058
        %v1061 = vcvt.s32.f32 %v1059
        %1062 = vmin.xlane.f32.xlu0 %v1061
        %v1063 = vpop.xlane.xlu0 %1062
        %vm1064 = vcmp.eq.f32.partialorder %v1061, %v1063
        %v1065 = vsel %vm1064, %v1060, inf
        %1066 = vmin.xlane.f32.xlu0 %v1065
        %v1067 = vpop.xlane.xlu0 %1066
        %v1068 = vcvt.f32.s32 %v1067
        %v1069 = vcvt.f32.s32 %v1063
        %v1070 = vshll.u32 %v1069, 16
        %v1071 = vadd.s32 %v1070, %v1068
        %v1072 = vsel %vm414, %v846, 2147483647
        %v1073 = vand.u32 %v1072, 65535
        %v1074 = vshra.s32 %v1072, 16
        %v1075 = vcvt.s32.f32 %v1073
        %v1076 = vcvt.s32.f32 %v1074
        %1077 = vmin.xlane.f32.xlu0 %v1076
        %v1078 = vpop.xlane.xlu0 %1077
        %vm1079 = vcmp.eq.f32.partialorder %v1076, %v1078
        %v1080 = vsel %vm1079, %v1075, inf
        %1081 = vmin.xlane.f32.xlu0 %v1080
        %v1082 = vpop.xlane.xlu0 %1081
        %v1083 = vcvt.f32.s32 %v1082
        %v1084 = vcvt.f32.s32 %v1078
        %v1085 = vshll.u32 %v1084, 16
        %v1086 = vadd.s32 %v1085, %v1083
        %vm1087 = vcmp.eq.s32.totalorder %v413, %v861
        %vm1088 = vcmp.eq.s32.totalorder %v413, %v876
        %vm1089 = vcmp.eq.s32.totalorder %v413, %v891
        %vm1090 = vcmp.eq.s32.totalorder %v413, %v906
        %vm1091 = vcmp.eq.s32.totalorder %v413, %v921
        %vm1092 = vcmp.eq.s32.totalorder %v413, %v936
        %vm1093 = vcmp.eq.s32.totalorder %v413, %v951
        %vm1094 = vcmp.eq.s32.totalorder %v413, %v966
        %vm1095 = vcmp.eq.s32.totalorder %v413, %v981
        %vm1096 = vcmp.eq.s32.totalorder %v413, %v996
        %vm1097 = vcmp.eq.s32.totalorder %v413, %v1011
        %vm1098 = vcmp.eq.s32.totalorder %v413, %v1026
        %vm1099 = vcmp.eq.s32.totalorder %v413, %v1041
        %vm1100 = vcmp.eq.s32.totalorder %v413, %v1056
        %vm1101 = vcmp.eq.s32.totalorder %v413, %v1071
        %vm1102 = vcmp.eq.s32.totalorder %v413, %v1086
        %v1103 = vsel %vm1087, -inf, %v751
        %v1104 = vsel %vm1088, -inf, %v752
        %v1105 = vsel %vm1089, -inf, %v753
        %v1106 = vsel %vm1090, -inf, %v754
        %v1107 = vsel %vm1091, -inf, %v755
        %v1108 = vsel %vm1092, -inf, %v756
        %v1109 = vsel %vm1093, -inf, %v757
        %v1110 = vsel %vm1094, -inf, %v758
        %v1111 = vsel %vm1095, -inf, %v759
        %v1112 = vsel %vm1096, -inf, %v760
        %v1113 = vsel %vm1097, -inf, %v761
        %v1114 = vsel %vm1098, -inf, %v762
        %v1115 = vsel %vm1099, -inf, %v763
        %v1116 = vsel %vm1100, -inf, %v764
        %v1117 = vsel %vm1101, -inf, %v765
        %v1118 = vsel %vm1102, -inf, %v766
        %v1119 = vsel %vm414, %v1103, -inf
        %1120 = vmax.xlane.f32.xlu0 %v1119
        %v1121 = vpop.xlane.xlu0 %1120
        %v1122 = vsel %vm414, %v1104, -inf
        %1123 = vmax.xlane.f32.xlu0 %v1122
        %v1124 = vpop.xlane.xlu0 %1123
        %v1125 = vsel %vm414, %v1105, -inf
        %1126 = vmax.xlane.f32.xlu0 %v1125
        %v1127 = vpop.xlane.xlu0 %1126
        %v1128 = vsel %vm414, %v1106, -inf
        %1129 = vmax.xlane.f32.xlu0 %v1128
        %v1130 = vpop.xlane.xlu0 %1129
        %v1131 = vsel %vm414, %v1107, -inf
        %1132 = vmax.xlane.f32.xlu0 %v1131
        %v1133 = vpop.xlane.xlu0 %1132
        %v1134 = vsel %vm414, %v1108, -inf
        %1135 = vmax.xlane.f32.xlu0 %v1134
        %v1136 = vpop.xlane.xlu0 %1135
        %v1137 = vsel %vm414, %v1109, -inf
        %1138 = vmax.xlane.f32.xlu0 %v1137
        %v1139 = vpop.xlane.xlu0 %1138
        %v1140 = vsel %vm414, %v1110, -inf
        %1141 = vmax.xlane.f32.xlu0 %v1140
        %v1142 = vpop.xlane.xlu0 %1141
        %v1143 = vsel %vm414, %v1111, -inf
        %1144 = vmax.xlane.f32.xlu0 %v1143
        %v1145 = vpop.xlane.xlu0 %1144
        %v1146 = vsel %vm414, %v1112, -inf
        %1147 = vmax.xlane.f32.xlu0 %v1146
        %v1148 = vpop.xlane.xlu0 %1147
        %v1149 = vsel %vm414, %v1113, -inf
        %1150 = vmax.xlane.f32.xlu0 %v1149
        %v1151 = vpop.xlane.xlu0 %1150
        %v1152 = vsel %vm414, %v1114, -inf
        %1153 = vmax.xlane.f32.xlu0 %v1152
        %v1154 = vpop.xlane.xlu0 %1153
        %v1155 = vsel %vm414, %v1115, -inf
        %1156 = vmax.xlane.f32.xlu0 %v1155
        %v1157 = vpop.xlane.xlu0 %1156
        %v1158 = vsel %vm414, %v1116, -inf
        %1159 = vmax.xlane.f32.xlu0 %v1158
        %v1160 = vpop.xlane.xlu0 %1159
        %v1161 = vsel %vm414, %v1117, -inf
        %1162 = vmax.xlane.f32.xlu0 %v1161
        %v1163 = vpop.xlane.xlu0 %1162
        %v1164 = vsel %vm414, %v1118, -inf
        %1165 = vmax.xlane.f32.xlu0 %v1164
        %v1166 = vpop.xlane.xlu0 %1165
        %v1167 = vld [vmem:[#allocation2] sm:$0xff]
        %v1184 = vlaneseq
        %v1185 = vshrl.u32 %v1184, 7
        %v1186 = vsub.s32 %v413, %v1185
        %v1187 = vrot.slane %v1121, %v1186
        %v1188 = vadd.s32 %v413, 4294967288
        %v1189 = vlaneseq
        %v1190 = vshrl.u32 %v1189, 7
        %v1191 = vsub.s32 %v1188, %v1190
        %v1192 = vrot.slane %v1124, %v1191
        %vm1193 = vcmask 130112
        %v1194 = vsel %vm1193, %v1192, %v1187
        %v1195 = vlaneseq
        %v1196 = vshrl.u32 %v1195, 7
        %v1197 = vsub.s32 %v413, %v1196
        %v1198 = vrot.slane %v1127, %v1197
        %v1199 = vlaneseq
        %v1200 = vshrl.u32 %v1199, 7
        %v1201 = vsub.s32 %v1188, %v1200
        %v1202 = vrot.slane %v1130, %v1201
        %v1203 = vsel %vm1193, %v1202, %v1198
        %v1204 = vlaneseq
        %v1205 = vshrl.u32 %v1204, 7
        %v1206 = vsub.s32 %v413, %v1205
        %v1207 = vrot.slane %v1133, %v1206
        %v1208 = vlaneseq
        %v1209 = vshrl.u32 %v1208, 7
        %v1210 = vsub.s32 %v1188, %v1209
        %v1211 = vrot.slane %v1136, %v1210
        %v1212 = vsel %vm1193, %v1211, %v1207
        %v1213 = vlaneseq
        %v1214 = vshrl.u32 %v1213, 7
        %v1215 = vsub.s32 %v413, %v1214
        %v1216 = vrot.slane %v1139, %v1215
        %v1217 = vlaneseq
        %v1218 = vshrl.u32 %v1217, 7
        %v1219 = vsub.s32 %v1188, %v1218
        %v1220 = vrot.slane %v1142, %v1219
        %v1221 = vsel %vm1193, %v1220, %v1216
        %v1222 = vlaneseq
        %v1223 = vshrl.u32 %v1222, 7
        %v1224 = vsub.s32 %v413, %v1223
        %v1225 = vrot.slane %v1145, %v1224
        %v1226 = vlaneseq
        %v1227 = vshrl.u32 %v1226, 7
        %v1228 = vsub.s32 %v1188, %v1227
        %v1229 = vrot.slane %v1148, %v1228
        %v1230 = vsel %vm1193, %v1229, %v1225
        %v1231 = vlaneseq
        %v1232 = vshrl.u32 %v1231, 7
        %v1233 = vsub.s32 %v413, %v1232
        %v1234 = vrot.slane %v1151, %v1233
        %v1235 = vlaneseq
        %v1236 = vshrl.u32 %v1235, 7
        %v1237 = vsub.s32 %v1188, %v1236
        %v1238 = vrot.slane %v1154, %v1237
        %v1239 = vsel %vm1193, %v1238, %v1234
        %v1240 = vlaneseq
        %v1241 = vshrl.u32 %v1240, 7
        %v1242 = vsub.s32 %v413, %v1241
        %v1243 = vrot.slane %v1157, %v1242
        %v1244 = vlaneseq
        %v1245 = vshrl.u32 %v1244, 7
        %v1246 = vsub.s32 %v1188, %v1245
        %v1247 = vrot.slane %v1160, %v1246
        %v1248 = vsel %vm1193, %v1247, %v1243
        %v1249 = vlaneseq
        %v1250 = vshrl.u32 %v1249, 7
        %v1251 = vsub.s32 %v413, %v1250
        %v1252 = vrot.slane %v1163, %v1251
        %v1253 = vlaneseq
        %v1254 = vshrl.u32 %v1253, 7
        %v1255 = vsub.s32 %v1188, %v1254
        %v1256 = vrot.slane %v1166, %v1255
        %v1257 = vsel %vm1193, %v1256, %v1252
        %vm1258 = vcmask 1041409
        %v1259 = vsel %vm1258, %v1203, %v1194
        %vm1260 = vcmask 1042434
        %v1261 = vsel %vm1260, %v1212, %v1259
        %vm1262 = vcmask 1043459
        %v1263 = vsel %vm1262, %v1221, %v1261
        %vm1264 = vcmask 1044484
        %v1265 = vsel %vm1264, %v1230, %v1263
        %vm1266 = vcmask 1045509
        %v1267 = vsel %vm1266, %v1239, %v1265
        %vm1268 = vcmask 1046534
        %v1269 = vsel %vm1268, %v1248, %v1267
        %vm1270 = vcmask 1047559
        %v1271 = vsel %vm1270, %v1257, %v1269
        %vm1273 = vcmask 130048
        %v1274 = vsel %vm1273, %v1271, 0.0
        %1275 = vadd.xlane.f32.xlu0 %v1274
        %v1276 = vpop.xlane.xlu0 %1275
        %v1277 = vadd.f32 %v1167, %v1276
        %vm1278 = vcmask 7168
        %1279 = vst.msk [vmem:[#allocation2] sm:$0xff] %vm1278, %v1277
        %p1280 = scmp.eq.s32.totalorder %s22, 1
        // Predicated region
        $region41: #{tpu_custom_call.1} parent=31 // pred_check
          %p1281 = pneg %p1280
        $region42: #{tpu_custom_call.1} parent=31 // pred_check_branch
          %1283 = sbr.rel (%p1281) target = $region44
        $region43: #{tpu_custom_call.1} parent=31 // pred_region
          %v1284 = vld [vmem:[%s256] sm:$0xff]
          %1285 = vset.pattern.permute.xlu0 0
          %1286 = vperm.xlu0 %1285, %v1284
          %v1287 = vpop.permute.xlu0 %1286
          %vm1288 = vcmp.eq.s32.totalorder %v413, %v1287
          %v1289 = vsel %vm1288, 1, 0
          %v1290 = vcvt.s32.f32 %v1289
          %v1291 = vmul.f32 %v273, %v1290
          %v1292 = vsel %vm414, %v1291, 0.0
          %1293 = vadd.xlane.f32.xlu0 %v1292
          %v1294 = vpop.xlane.xlu0 %1293
          %v1295 = vld [vmem:[#allocation2] sm:$0xff]
          %v1296 = vmul.f32 %v1295, 0.03125
          %v1297 = vadd.f32 %v1296, 1.0
          %v1298 = vsub.f32 %v1297, %v1294
          %v1299 = vmax.f32 %v1298, 0.0
          %1300 = vst.msk [vmem:[%s266] sm:$0xff] %vm1278, %v1299
        $region44: #{tpu_custom_call.1} parent=31 // pred_fallthru
          _
        %p1301 = scmp.lt.s32.totalorder %s21, 1
        %s1302 = scalar_select %p1301, %s21, 1
        %s1303 = smul.addr %s1302, 8
        %s1304 = scalar_lea.vmem %s3, %s1303
        // Predicated region
        $region45: #{tpu_custom_call.1} parent=31 // pred_check
          %p1305 = pneg %p127
        $region46: #{tpu_custom_call.1} parent=31 // pred_check_branch
          %1307 = sbr.rel (%p1305) target = $region48
        $region47: #{tpu_custom_call.1} parent=31 // pred_region
          _
        $region48: #{tpu_custom_call.1} parent=31 // pred_fallthru
          _
      $region32: #{tpu_custom_call.1} parent=5 // pred_fallthru
        _
      %p1308 = scmp.le.s32.totalorder 2, %s12
      // Predicated region
      $region49: #{tpu_custom_call.1} parent=5 // pred_check
        %p1309 = pneg %p1308
      $region50: #{tpu_custom_call.1} parent=5 // pred_check_branch
        %1311 = sbr.rel (%p1309) target = $region52
      $region51: #{tpu_custom_call.1} parent=5 // pred_region
        %s1312 = ssub.s32 %s12, 2
        // Predicated region
        $region53: #{tpu_custom_call.1} parent=51 // pred_check
          %p1313 = pneg %p133
        $region54: #{tpu_custom_call.1} parent=51 // pred_check_branch
          %1315 = sbr.rel (%p1313) target = $region56
        $region55: #{tpu_custom_call.1} parent=51 // pred_region
          %p1316 = scmp.lt.s32.totalorder %s23, 1
          %s1317 = scalar_select %p1316, %s23, 1
          %s1318 = smul.addr %s1317, 8
          %s1319 = scalar_lea.vmem %s3, %s1318
        $region56: #{tpu_custom_call.1} parent=51 // pred_fallthru
          _
      $region52: #{tpu_custom_call.1} parent=5 // pred_fallthru
        _
    $region6: #{tpu_custom_call.1} parent=1 // loop_footer
      %s16 = sadd.s32 1, %s12
    $region7: #{tpu_custom_call.1} parent=1 // loop_footer_branch
      %11 = sbr.rel target = $region3
    $region8: #{tpu_custom_call.1} parent=1 // loop_exit
      _
    %1320 = vsyncpa [#allocation4], 1
    %s1321 = scalar_lea.sflag [#allocation4], 1
    %1322 = vsyncpa %s1321, 1

</llo_original>
